<compile_context>
chip_gen: v6e
topology: v6e:2x2x1
jax: 0.10.0
libtpu: 0.0.40
codegen_flags: <defaults>
</compile_context>

<pallas_src>
import jax
import jax.numpy as jnp
from jax.experimental import pallas as pl
from jax.experimental.pallas import tpu as pltpu


def _round_up(x: int, m: int) -> int:
    return ((x + m - 1) // m) * m


def _cdiv(a: int, b: int) -> int:
    return (a + b - 1) // b


def _linear_kernel(x_ref, w_ref, b_ref, o_ref):
    # x_ref: (tm, K_p), w_ref: (K_p, tn), b_ref: (1, tn) f32, o_ref: (tm, tn).
    # Single full-depth dot; accumulation stays in the MXU result buffer (MRB on
    # v7x), bias added once, one lane-dense store.
    acc = jnp.dot(x_ref[...], w_ref[...], preferred_element_type=jnp.float32)
    o_ref[...] = (acc + b_ref[...]).astype(o_ref.dtype)


def prepare_answer_decoder_params(weight, bias, *, compute_dtype=None):
    """One-time (init-time) parameter prep.

    weight: PyTorch layout [num_classes, 2*embed_size]; bias: [num_classes].
    Returns (w_kc [K_p, C_p], bias_row [1, C_p] f32, num_classes).
    Call this once and reuse the result for every forward call so the weight
    cast/pad/transpose never shows up on the per-call HBM path.
    """
    C, K = weight.shape
    if compute_dtype is None:
        compute_dtype = weight.dtype
    K_p = _round_up(K, 128)
    C_p = _round_up(C, 128)

    w_kc = jnp.transpose(weight.astype(compute_dtype))  # [K, C]
    if (K_p, C_p) != (K, C):
        w_kc = jnp.pad(w_kc, ((0, K_p - K), (0, C_p - C)))

    b = bias.astype(jnp.float32)
    if C_p != C:
        b = jnp.pad(b, (0, C_p - C))
    return w_kc, b.reshape(1, C_p), C


def answer_decoder_vqabycls_prepared(
    combined_features,   # [B, K]
    w_kc,                # [K_p, C_p]  (from prepare_answer_decoder_params)
    bias_row,            # [1, C_p] f32
    num_classes,
    *,
    tm_max: int = 512,
    tn_max: int = 512,
    out_dtype=None,
):
    """logits[b, c] = sum_k x[b, k] * W[c, k] + bias[c]  (== nn.Linear(x))."""
    B, K = combined_features.shape
    K_p, C_p = w_kc.shape
    assert K <= K_p and num_classes <= C_p

    compute_dtype = w_kc.dtype
    if out_dtype is None:
        out_dtype = combined_features.dtype

    # --- Tile sizing -------------------------------------------------------
    # Rows: pack bf16 16-deep per sublane group; spread the batch evenly over
    # the M tiles so B=300-style cases don't pad up to a full 512-row tile.
    row_align = 16 if jnp.dtype(compute_dtype) == jnp.dtype(jnp.bfloat16) else 8
    tm_max = max(row_align, (tm_max // row_align) * row_align)
    num_m = max(1, _cdiv(_round_up(B, row_align), tm_max))
    tm = _round_up(_cdiv(B, num_m), row_align)
    B_p = tm * num_m

    # Classes: lane-dense multiple of 128 that divides C_p (C_p is a multiple
    # of 128, so this always terminates at >= 128).
    tn = min(max(128, (tn_max // 128) * 128), C_p)
    while C_p % tn != 0:
        tn -= 128
    num_n = C_p // tn

    # --- Activation prep (small; per call) ---------------------------------
    x = combined_features.astype(compute_dtype)
    if (B_p, K_p) != (B, K):
        x = jnp.pad(x, ((0, B_p - B), (0, K_p - K)))  # zero K-pad adds 0 to sum

    # --- VMEM budget / cost hint -------------------------------------------
    in_bytes = jnp.dtype(compute_dtype).itemsize
    out_bytes = jnp.dtype(out_dtype).itemsize
    tile_bytes = 2 * (tm * K_p * in_bytes + K_p * tn * in_bytes
                      + tm * tn * out_bytes + tn * 4) + (1 << 20)
    vmem_limit = min(48 * 1024 * 1024, max(32 * 1024 * 1024, int(tile_bytes)))

    cost = pl.CostEstimate(
        flops=2 * B_p * C_p * K_p,
        transcendentals=0,
        bytes_accessed=(B_p * K_p * in_bytes + K_p * C_p * in_bytes
                        + B_p * C_p * out_bytes + C_p * 4),
    )

    out = pl.pallas_call(
        _linear_kernel,
        out_shape=jax.ShapeDtypeStruct((B_p, C_p), out_dtype),
        grid_spec=pltpu.PrefetchScalarGridSpec(
            num_scalar_prefetch=0,
            grid=(num_m, num_n),
            in_specs=[
                pl.BlockSpec((tm, K_p), lambda i, j: (i, 0)),   # activations
                pl.BlockSpec((K_p, tn), lambda i, j: (0, j)),   # weight [K, C]
                pl.BlockSpec((1, tn), lambda i, j: (0, j)),     # bias
            ],
            out_specs=pl.BlockSpec((tm, tn), lambda i, j: (i, j)),
        ),
        compiler_params=pltpu.CompilerParams(
            dimension_semantics=("parallel", "parallel"),
            vmem_limit_bytes=vmem_limit,
        ),
        cost_estimate=cost,
    )(x, w_kc, bias_row)

    return out[:B, :num_classes]


def answer_decoder_vqabycls(combined_features, weight, bias, *,
                            compute_dtype=None, **kwargs):
    """Convenience one-shot wrapper (prep + run). For repeated calls, hoist
    prepare_answer_decoder_params() to init time and use the *_prepared path."""
    w_kc, b_row, num_classes = prepare_answer_decoder_params(
        weight, bias, compute_dtype=compute_dtype)
    return answer_decoder_vqabycls_prepared(
        combined_features, w_kc, b_row, num_classes, **kwargs)


if __name__ == "__main__":
    # Small shapes consistent with the module:
    #   embed_size = 32  -> in_features = embed_size * 2 = 64
    #   num_classes = 16, batch = 2
    batch = 2
    embed_size = 32
    in_features = embed_size * 2
    num_classes = 16

    key = jax.random.PRNGKey(0)
    k_x, k_w, k_b = jax.random.split(key, 3)

    # Deterministic init mimicking nn.Linear default (U[-1/sqrt(K), 1/sqrt(K)]).
    bound = 1.0 / jnp.sqrt(jnp.float32(in_features))
    weight = jax.random.uniform(
        k_w, (num_classes, in_features), jnp.float32, -bound, bound
    )  # PyTorch layout [out, in]
    bias = jax.random.uniform(k_b, (num_classes,), jnp.float32, -bound, bound)
    combined_features = jax.random.normal(k_x, (batch, in_features), jnp.float32)

    ref = combined_features @ weight.T + bias

    # f32-compute path. Note: TPU MXU may evaluate f32 matmuls via bf16 passes at
    # default precision, so we allow a modest tolerance rather than 1e-5.
    w_kc, b_row, C = prepare_answer_decoder_params(weight, bias)   # init-time
    logits = answer_decoder_vqabycls_prepared(combined_features, w_kc, b_row, C)
    logits = jax.block_until_ready(logits)
    assert logits.shape == (batch, num_classes)
    assert jnp.allclose(logits, ref, atol=2e-2, rtol=2e-2)

    # bf16-compute path (recommended for production sizes) — loose tolerance.
    w_kc_bf, b_row_bf, _ = prepare_answer_decoder_params(
        weight, bias, compute_dtype=jnp.bfloat16)                  # init-time
    logits_bf16 = answer_decoder_vqabycls_prepared(
        combined_features, w_kc_bf, b_row_bf, C)
    logits_bf16 = jax.block_until_ready(logits_bf16)
    assert logits_bf16.shape == (batch, num_classes)
    assert jnp.allclose(logits_bf16, ref, atol=5e-2, rtol=5e-2)

    print("KERNEL_OK")
</pallas_src>

<mosaic_0001>
module attributes {stable_mosaic.version = 11 : i64} {
  func.func @_linear_kernel(%arg0: i32, %arg1: i32, %arg2: memref<8x128xf32, #tpu.memory_space<vmem>>, %arg3: memref<128x128xf32, #tpu.memory_space<vmem>>, %arg4: memref<1x128xf32, #tpu.memory_space<vmem>>, %arg5: memref<8x128xf32, #tpu.memory_space<vmem>>) attributes {dimension_semantics = [#tpu.dimension_semantics<parallel>, #tpu.dimension_semantics<parallel>], iteration_bounds = array<i64: 1, 1>, scalar_prefetch = 0 : i64, scratch_operands = 0 : i64, tpu.core_type = #tpu.core_type<tc>, window_params = [{transform_indices = @transform_0, window_bounds = array<i64: 8, 128>}, {transform_indices = @transform_1, window_bounds = array<i64: 128, 128>}, {transform_indices = @transform_2, window_bounds = array<i64: 1, 128>}, {transform_indices = @transform_3, window_bounds = array<i64: 8, 128>}]} {
    %c0 = arith.constant 0 : index
    %c0_0 = arith.constant 0 : index
    %0 = vector.load %arg2[%c0, %c0_0] : memref<8x128xf32, #tpu.memory_space<vmem>>, vector<8x128xf32>
    %c0_1 = arith.constant 0 : index
    %c0_2 = arith.constant 0 : index
    %1 = vector.load %arg3[%c0_1, %c0_2] : memref<128x128xf32, #tpu.memory_space<vmem>>, vector<128x128xf32>
    %cst = arith.constant dense<0.000000e+00> : vector<8x128xf32>
    %2 = tpu.matmul %0, %1, %cst {dimension_numbers = #tpu.dot_dimension_numbers<[1], [0], [0], [1], [0, 0, 1, 1], [], []>} : vector<8x128xf32>, vector<128x128xf32>, vector<8x128xf32> -> vector<8x128xf32>
    %c0_3 = arith.constant 0 : index
    %c0_4 = arith.constant 0 : index
    %3 = vector.load %arg4[%c0_3, %c0_4] : memref<1x128xf32, #tpu.memory_space<vmem>>, vector<1x128xf32>
    %4 = vector.broadcast %3 : vector<1x128xf32> to vector<8x128xf32>
    %5 = arith.addf %2, %4 : vector<8x128xf32>
    %c0_5 = arith.constant 0 : index
    %c0_6 = arith.constant 0 : index
    %6 = vector.load %arg5[%c0_5, %c0_6] : memref<8x128xf32, #tpu.memory_space<vmem>>, vector<8x128xf32>
    tpu.vector_store %arg5[%c0_5, %c0_6], %5 {strides = array<i32>} : memref<8x128xf32, #tpu.memory_space<vmem>>, vector<8x128xf32>,
    return
  }
  func.func @transform_0(%arg0: i32, %arg1: i32) -> (i32, i32) {
    %c0_i32 = arith.constant 0 : i32
    %c0_i32_0 = arith.constant 0 : i32
    return %arg0, %c0_i32 : i32, i32
  }
  func.func @transform_1(%arg0: i32, %arg1: i32) -> (i32, i32) {
    %c0_i32 = arith.constant 0 : i32
    %c0_i32_0 = arith.constant 0 : i32
    return %c0_i32, %arg1 : i32, i32
  }
  func.func @transform_2(%arg0: i32, %arg1: i32) -> (i32, i32) {
    %c0_i32 = arith.constant 0 : i32
    %c0_i32_0 = arith.constant 0 : i32
    return %c0_i32, %arg1 : i32, i32
  }
  func.func @transform_3(%arg0: i32, %arg1: i32) -> (i32, i32) {
    %c0_i32 = arith.constant 0 : i32
    return %arg0, %arg1 : i32, i32
  }
}

</mosaic_0001>

<llo_original>
// kernel: tpu_custom_call.1
$region0: #{tpu_custom_call.1}
  #allocation0 [shape = 'u32[]', space=smem, size = 0x4, offset = 0x4, fixed_abs, tag = 'smem constant byte address 0x4 - core index']
  #allocation1 [shape = 'u32[144,128]{1,0:T(1,128)}', space=vmem, size = 0x12000, scoped, tag = 'internal scratch']
  %s0 = inlined_call_operand.hbm [shape: f32[8,128], index: 0, kind: input, shape index: {}]
  %s1 = inlined_call_operand.hbm [shape: f32[128,128], index: 1, kind: input, shape index: {}]
  %s2 = inlined_call_operand.vmem [shape: f32[1,128], index: 2, kind: input, shape index: {}]
  %s3 = inlined_call_operand.hbm [shape: f32[8,128], index: 3, kind: output, shape index: {}]
  %s4 = sld [smem:[#allocation0]]
  $region30: #{tpu_custom_call.1} parent=0
    _
  %s6 = ssub.s32 1, %s4
  %s7 = scalar_select 0, %s6, %s4
  $region1: #{tpu_custom_call.1} parent=0
    #allocation2 [shape = 'u8[4096]{0}', space=vmem, size = 0x1000, scoped, tag = 'input window, operand 0, single buffered']
    #allocation3 [shape = 's32[1]{0}', space=sflag, size = 0x4, scoped, tag = 'scoped memory for tpu_custom_call.1']
    #allocation4 [shape = 's32[1]{0}', space=sflag, size = 0x4, scoped, tag = 'scoped memory for tpu_custom_call.1']
    #allocation5 [shape = 'u8[65536]{0}', space=vmem, size = 0x10000, scoped, tag = 'input window, operand 1, single buffered']
    #allocation6 [shape = 's32[1]{0}', space=sflag, size = 0x4, scoped, tag = 'scoped memory for tpu_custom_call.1']
    #allocation7 [shape = 'u8[4096]{0}', space=vmem, size = 0x1000, scoped, tag = 'output window, operand 0, single buffered']
    %8 = vsyncpa [#allocation3], 0
    %9 = vsyncpa [#allocation6], 0
    %10 = vsyncpa [#allocation4], 0
    // Predicated region
    $region2: #{tpu_custom_call.1} parent=1 // pred_check
      _
    $region3: #{tpu_custom_call.1} parent=1 // pred_check_branch
      %12 = sbr.rel (0) target = $region5
    $region4: #{tpu_custom_call.1} parent=1 // pred_region
      %s14 = ssub.s32 128, 128
      %15 = vsyncadd [#allocation3], %s14
      %s17 = sshll.u32 [#allocation2], 4
      %s18 = int_to_ptr.vmem [resolvable:$true] %s17
      %20 = dma.hbm_to_vmem [thread:$0]  %s0, 128, %s18, [#allocation3]
    $region5: #{tpu_custom_call.1} parent=1 // pred_fallthru
      _
    // Predicated region
    $region6: #{tpu_custom_call.1} parent=1 // pred_check
      _
    $region7: #{tpu_custom_call.1} parent=1 // pred_check_branch
      %22 = sbr.rel (0) target = $region9
    $region8: #{tpu_custom_call.1} parent=1 // pred_region
      %s24 = ssub.s32 2048, 2048
      %25 = vsyncadd [#allocation6], %s24
      %s26 = sshll.u32 [#allocation5], 4
      %s27 = int_to_ptr.vmem [resolvable:$true] %s26
      %32 = dma.hbm_to_vmem [thread:$0]  %s1, 2048, %s27, [#allocation6], 128, 128, 8
    $region9: #{tpu_custom_call.1} parent=1 // pred_fallthru
      _
    // Predicated region
    $region10: #{tpu_custom_call.1} parent=1 // pred_check
      _
    $region11: #{tpu_custom_call.1} parent=1 // pred_check_branch
      %34 = sbr.rel (0) target = $region13
    $region12: #{tpu_custom_call.1} parent=1 // pred_region
      _
    $region13: #{tpu_custom_call.1} parent=1 // pred_fallthru
      _
    // Predicated region
    $region14: #{tpu_custom_call.1} parent=1 // pred_check
      _
    $region15: #{tpu_custom_call.1} parent=1 // pred_check_branch
      %36 = sbr.rel (0) target = $region17
    $region16: #{tpu_custom_call.1} parent=1 // pred_region
      %37 = dma.done [#allocation3], 128
    $region17: #{tpu_custom_call.1} parent=1 // pred_fallthru
      _
    // Predicated region
    $region18: #{tpu_custom_call.1} parent=1 // pred_check
      _
    $region19: #{tpu_custom_call.1} parent=1 // pred_check_branch
      %39 = sbr.rel (0) target = $region21
    $region20: #{tpu_custom_call.1} parent=1 // pred_region
      %40 = dma.done [#allocation6], 2048
    $region21: #{tpu_custom_call.1} parent=1 // pred_fallthru
      _
    %v41 = vld [vmem:[#allocation2] sm:$0xff]
    %v42 = vld [vmem:[#allocation5] sm:$0xff]
    %v43 = vld [vmem:[#allocation5 + $0x8] sm:$0xff]
    %v44 = vld [vmem:[#allocation5 + $0x10] sm:$0xff]
    %v45 = vld [vmem:[#allocation5 + $0x18] sm:$0xff]
    %v46 = vld [vmem:[#allocation5 + $0x20] sm:$0xff]
    %v47 = vld [vmem:[#allocation5 + $0x28] sm:$0xff]
    %v48 = vld [vmem:[#allocation5 + $0x30] sm:$0xff]
    %v49 = vld [vmem:[#allocation5 + $0x38] sm:$0xff]
    %v50 = vld [vmem:[#allocation5 + $0x40] sm:$0xff]
    %v51 = vld [vmem:[#allocation5 + $0x48] sm:$0xff]
    %v52 = vld [vmem:[#allocation5 + $0x50] sm:$0xff]
    %v53 = vld [vmem:[#allocation5 + $0x58] sm:$0xff]
    %v54 = vld [vmem:[#allocation5 + $0x60] sm:$0xff]
    %v55 = vld [vmem:[#allocation5 + $0x68] sm:$0xff]
    %v56 = vld [vmem:[#allocation5 + $0x70] sm:$0xff]
    %v57 = vld [vmem:[#allocation5 + $0x78] sm:$0xff]
    %v58 = vld [vmem:[%s2] sm:$0x1]
    %v60 = vlaneseq
    %v61 = vshrl.u32 %v60, 7
    %v62 = vsub.s32 0, %v61
    %v63 = vrot.slane %v58, %v62
    %65 = vmatprep.subr.mxu0 0.0
    %66 = vmatpush1.msra.mxu0 %v57
    %67 = vmatprep.subr.mxu0 0.0
    %68 = vmatpush1.msra.mxu0 %v56
    %69 = vmatprep.subr.mxu0 0.0
    %70 = vmatpush1.msra.mxu0 %v55
    %71 = vmatprep.subr.mxu0 0.0
    %72 = vmatpush1.msra.mxu0 %v54
    %73 = vmatprep.subr.mxu0 0.0
    %74 = vmatpush1.msra.mxu0 %v53
    %75 = vmatprep.subr.mxu0 0.0
    %76 = vmatpush1.msra.mxu0 %v52
    %77 = vmatprep.subr.mxu0 0.0
    %78 = vmatpush1.msra.mxu0 %v51
    %79 = vmatprep.subr.mxu0 0.0
    %80 = vmatpush1.msra.mxu0 %v50
    %81 = vmatprep.subr.mxu0 0.0
    %82 = vmatpush1.msra.mxu0 %v49
    %83 = vmatprep.subr.mxu0 0.0
    %84 = vmatpush1.msra.mxu0 %v48
    %85 = vmatprep.subr.mxu0 0.0
    %86 = vmatpush1.msra.mxu0 %v47
    %87 = vmatprep.subr.mxu0 0.0
    %88 = vmatpush1.msra.mxu0 %v46
    %89 = vmatprep.subr.mxu0 0.0
    %90 = vmatpush1.msra.mxu0 %v45
    %91 = vmatprep.subr.mxu0 0.0
    %92 = vmatpush1.msra.mxu0 %v44
    %93 = vmatprep.subr.mxu0 0.0
    %94 = vmatpush1.msra.mxu0 %v43
    %95 = vmatprep.subr.mxu0 0.0
    %96 = vmatpush1.msra.mxu0 %v42
    %97 = vmatprep.subr.mxu0 0.0
    %98 = vmatpush2.msra.mxu0 0.0
    %99 = vmatprep.subr.mxu0 0.0
    %100 = vmatpush2.msra.mxu0 0.0
    %101 = vmatprep.subr.mxu0 0.0
    %102 = vmatpush2.msra.mxu0 0.0
    %103 = vmatprep.subr.mxu0 0.0
    %104 = vmatpush2.msra.mxu0 0.0
    %105 = vmatprep.subr.mxu0 0.0
    %106 = vmatpush2.msra.mxu0 0.0
    %107 = vmatprep.subr.mxu0 0.0
    %108 = vmatpush2.msra.mxu0 0.0
    %109 = vmatprep.subr.mxu0 0.0
    %110 = vmatpush2.msra.mxu0 0.0
    %111 = vmatprep.subr.mxu0 0.0
    %112 = vmatpush2.msra.mxu0 0.0
    %113 = vmatprep.subr.mxu0 0.0
    %114 = vmatpush2.msra.mxu0 0.0
    %115 = vmatprep.subr.mxu0 0.0
    %116 = vmatpush2.msra.mxu0 0.0
    %117 = vmatprep.subr.mxu0 0.0
    %118 = vmatpush2.msra.mxu0 0.0
    %119 = vmatprep.subr.mxu0 0.0
    %120 = vmatpush2.msra.mxu0 0.0
    %121 = vmatprep.subr.mxu0 0.0
    %122 = vmatpush2.msra.mxu0 0.0
    %123 = vmatprep.subr.mxu0 0.0
    %124 = vmatpush2.msra.mxu0 0.0
    %125 = vmatprep.subr.mxu0 0.0
    %126 = vmatpush2.msra.mxu0 0.0
    %127 = vmatprep.subr.mxu0 0.0
    %128 = vmatpush2.msra.mxu0 0.0
    %129 = vmatprep.mubr.f32.mxu0 0.0
    %130 = vmatmul.mubr.f32.gmra.mxu0 %v41
    %v131 = vpop.f32.mrf.mxu0
    %v132 = vadd.f32 %v63, %v131
    %v133 = vpop.f32.mrf.mxu0
    %134 = vdwg.mxu0
    %135 = vst [vmem:[#allocation7] sm:$0xff] %v132
    // Predicated region
    $region22: #{tpu_custom_call.1} parent=1 // pred_check
      _
    $region23: #{tpu_custom_call.1} parent=1 // pred_check_branch
      %137 = sbr.rel (0) target = $region25
    $region24: #{tpu_custom_call.1} parent=1 // pred_region
      %s139 = ssub.s32 128, 128
      %140 = vsyncadd [#allocation4], %s139
      %s142 = sshll.u32 [#allocation7], 4
      %s143 = int_to_ptr.vmem [resolvable:$true] %s142
      %145 = dma.vmem_to_hbm [thread:$0]  %s143, 128, %s3, [#allocation4]
    $region25: #{tpu_custom_call.1} parent=1 // pred_fallthru
      _
    // Predicated region
    $region26: #{tpu_custom_call.1} parent=1 // pred_check
      _
    $region27: #{tpu_custom_call.1} parent=1 // pred_check_branch
      %147 = sbr.rel (0) target = $region29
    $region28: #{tpu_custom_call.1} parent=1 // pred_region
      %148 = dma.done [#allocation4], 128
    $region29: #{tpu_custom_call.1} parent=1 // pred_fallthru
      _
    %149 = vsyncpa [#allocation3], 1
    %150 = vsyncpa [#allocation6], 1
    %151 = vsyncpa [#allocation4], 1

</llo_original>
